<compile_context>
chip_gen: v6e
topology: v6e:2x2x1
jax: 0.10.0
libtpu: 0.0.40
codegen_flags: <defaults>
</compile_context>

<pallas_src>
import functools

import jax
import jax.numpy as jnp
from jax import lax
from jax.experimental import pallas as pl
from jax.experimental.pallas import tpu as pltpu

EPS = 1e-5


def _round_up(v: int, m: int) -> int:
    return ((v + m - 1) // m) * m


def mlp_layer_kernel(x_ref, wt_ref, gamma_ref, beta_ref, o_ref, *, n_real):
    """Grid = (out_tiles [parallel], in_tiles [arbitrary reduction, last]).

    o_ref (f32, resident across the k axis) doubles as the matmul accumulator.
    """
    k = pl.program_id(1)

    @pl.when(k == 0)
    def _init():
        o_ref[...] = jnp.zeros_like(o_ref)

    # Linear (no bias: exactly cancelled by training-mode BatchNorm mean subtraction).
    o_ref[...] += jnp.dot(x_ref[...], wt_ref[...],
                          preferred_element_type=jnp.float32)

    @pl.when(k == pl.num_programs(1) - 1)
    def _finalize():
        y = o_ref[...]                                     # (N_pad, tn) f32
        inv_n = jnp.float32(1.0 / n_real)
        # One-pass batch stats.  Padded batch rows are exactly zero (zero-padded x,
        # no bias), so dividing the padded sums by the *real* batch size is exact.
        s = jnp.sum(y, axis=0, keepdims=True)
        ssq = jnp.sum(y * y, axis=0, keepdims=True)
        mean = s * inv_n
        var = jnp.maximum(ssq * inv_n - mean * mean, 0.0)  # biased var, clamp fp noise
        # Fold gamma and rsqrt(var+eps) into one per-feature scale (EUP rsqrt).
        scale = gamma_ref[...] * lax.rsqrt(var + EPS)
        z = (y - mean) * scale + beta_ref[...]
        o_ref[...] = jnp.maximum(z, 0.0)                   # ReLU


def mlp_layer(x, wt, gamma, beta, *, tile_out=256, tile_in=512,
              use_bf16_matmul=False):
    """x: (N, in); wt: (in, out) [pre-transposed]; gamma/beta: (out,).

    Reproduces nn.Linear -> nn.BatchNorm1d (training-mode batch stats, eps=1e-5)
    -> nn.ReLU.  The Linear bias is intentionally omitted (exactly cancelled by BN).
    """
    n, kin = x.shape
    kin_w, m = wt.shape
    assert kin == kin_w

    # Pad to lane/sublane-friendly shapes.
    n_pad = _round_up(n, 8)
    tn = min(tile_out, _round_up(m, 128))
    tk = min(tile_in, _round_up(kin, 128))
    m_pad = _round_up(m, tn)
    k_pad = _round_up(kin, tk)

    x_p = jnp.pad(x, ((0, n_pad - n), (0, k_pad - kin)))
    wt_p = jnp.pad(wt, ((0, k_pad - kin), (0, m_pad - m)))
    g_p = jnp.pad(gamma.reshape(1, m), ((0, 0), (0, m_pad - m)))
    b_p = jnp.pad(beta.reshape(1, m), ((0, 0), (0, m_pad - m)))

    if use_bf16_matmul:
        # v6e/v7x: bf16 MXU inputs with f32 accumulation (~2x MXU throughput, half the
        # x/W traffic).  Off by default to keep exact f32 numerics for the small demo.
        x_p = x_p.astype(jnp.bfloat16)
        wt_p = wt_p.astype(jnp.bfloat16)

    grid = (m_pad // tn, k_pad // tk)
    kernel = functools.partial(mlp_layer_kernel, n_real=n)

    out_padded = pl.pallas_call(
        kernel,
        out_shape=jax.ShapeDtypeStruct((n_pad, m_pad), jnp.float32),
        grid_spec=pltpu.PrefetchScalarGridSpec(
            num_scalar_prefetch=0,
            grid=grid,
            in_specs=[
                pl.BlockSpec((n_pad, tk), lambda j, k: (0, k)),   # x: whole batch, k-slab
                pl.BlockSpec((tk, tn), lambda j, k: (k, j)),      # W^T tile
                pl.BlockSpec((1, tn), lambda j, k: (0, j)),       # gamma tile
                pl.BlockSpec((1, tn), lambda j, k: (0, j)),       # beta tile
            ],
            out_specs=pl.BlockSpec((n_pad, tn), lambda j, k: (0, j)),
        ),
        compiler_params=pltpu.CompilerParams(
            dimension_semantics=("parallel", "arbitrary"),
        ),
    )(x_p, wt_p, g_p, b_p)

    return out_padded[:n, :m]


def reference(x, weight, bias, gamma, beta):
    """Pure-JAX reference matching the PyTorch module (Linear -> BN(train) -> ReLU)."""
    y = x @ weight.T + bias
    mean = jnp.mean(y, axis=0, keepdims=True)
    var = jnp.mean((y - mean) ** 2, axis=0, keepdims=True)
    y_hat = (y - mean) / jnp.sqrt(var + EPS)
    return jnp.maximum(y_hat * gamma + beta, 0.0)


if __name__ == "__main__":
    in_features, out_features, batch = 32, 32, 8

    key = jax.random.PRNGKey(0)
    kx, kw, kb = jax.random.split(key, 3)

    x = jax.random.normal(kx, (batch, in_features), dtype=jnp.float32)

    # Deterministic PyTorch-style Linear init.
    bound = 1.0 / (in_features ** 0.5)
    weight = jax.random.uniform(kw, (out_features, in_features),
                                minval=-bound, maxval=bound, dtype=jnp.float32)
    bias = jax.random.uniform(kb, (out_features,),
                              minval=-bound, maxval=bound, dtype=jnp.float32)
    gamma = jnp.ones((out_features,), dtype=jnp.float32)   # BatchNorm1d weight
    beta = jnp.zeros((out_features,), dtype=jnp.float32)   # BatchNorm1d bias

    # Weight transpose done ONCE outside the hot path (PyTorch stores (out, in)).
    wt = weight.T                                          # (in, out)

    out = mlp_layer(x, wt, gamma, beta)
    jax.block_until_ready(out)

    # Reference includes the Linear bias; the kernel omits it because training-mode
    # BatchNorm cancels a per-feature constant exactly.
    ref = reference(x, weight, bias, gamma, beta)
    assert out.shape == (batch, out_features)
    assert jnp.allclose(out, ref, atol=1e-4, rtol=1e-4), float(jnp.max(jnp.abs(out - ref)))

    print("KERNEL_OK")
</pallas_src>

<mosaic_0001>
module attributes {stable_mosaic.version = 11 : i64} {
  func.func @mlp_layer_kernel(%arg0: i32, %arg1: i32, %arg2: memref<8x128xf32, #tpu.memory_space<vmem>>, %arg3: memref<128x128xf32, #tpu.memory_space<vmem>>, %arg4: memref<1x128xf32, #tpu.memory_space<vmem>>, %arg5: memref<1x128xf32, #tpu.memory_space<vmem>>, %arg6: memref<8x128xf32, #tpu.memory_space<vmem>>) attributes {dimension_semantics = [#tpu.dimension_semantics<parallel>, #tpu.dimension_semantics<arbitrary>], iteration_bounds = array<i64: 1, 1>, scalar_prefetch = 0 : i64, scratch_operands = 0 : i64, tpu.core_type = #tpu.core_type<tc>, window_params = [{transform_indices = @transform_0, window_bounds = array<i64: 8, 128>}, {transform_indices = @transform_1, window_bounds = array<i64: 128, 128>}, {transform_indices = @transform_2, window_bounds = array<i64: 1, 128>}, {transform_indices = @transform_3, window_bounds = array<i64: 1, 128>}, {transform_indices = @transform_4, window_bounds = array<i64: 8, 128>}]} {
    %c0_i32 = arith.constant 0 : i32
    %0 = arith.cmpi eq, %arg1, %c0_i32 : i32
    %1 = arith.extui %0 : i1 to i32
    %c0_i32_0 = arith.constant 0 : i32
    %2 = arith.cmpi ne, %1, %c0_i32_0 : i32
    scf.if %2 {
      %cst_10 = arith.constant 0.000000e+00 : f32
      %12 = vector.broadcast %cst_10 : f32 to vector<8x128xf32>
      %c0_11 = arith.constant 0 : index
      %c0_12 = arith.constant 0 : index
      %13 = vector.load %arg6[%c0_11, %c0_12] : memref<8x128xf32, #tpu.memory_space<vmem>>, vector<8x128xf32>
      tpu.vector_store %arg6[%c0_11, %c0_12], %12 {strides = array<i32>} : memref<8x128xf32, #tpu.memory_space<vmem>>, vector<8x128xf32>,
    } else {
    }
    %c0 = arith.constant 0 : index
    %c0_1 = arith.constant 0 : index
    %3 = vector.load %arg6[%c0, %c0_1] : memref<8x128xf32, #tpu.memory_space<vmem>>, vector<8x128xf32>
    %c0_2 = arith.constant 0 : index
    %c0_3 = arith.constant 0 : index
    %4 = vector.load %arg2[%c0_2, %c0_3] : memref<8x128xf32, #tpu.memory_space<vmem>>, vector<8x128xf32>
    %c0_4 = arith.constant 0 : index
    %c0_5 = arith.constant 0 : index
    %5 = vector.load %arg3[%c0_4, %c0_5] : memref<128x128xf32, #tpu.memory_space<vmem>>, vector<128x128xf32>
    %cst = arith.constant dense<0.000000e+00> : vector<8x128xf32>
    %6 = tpu.matmul %4, %5, %cst {dimension_numbers = #tpu.dot_dimension_numbers<[1], [0], [0], [1], [0, 0, 1, 1], [], []>} : vector<8x128xf32>, vector<128x128xf32>, vector<8x128xf32> -> vector<8x128xf32>
    %7 = arith.addf %3, %6 : vector<8x128xf32>
    %c0_6 = arith.constant 0 : index
    %c0_7 = arith.constant 0 : index
    %8 = vector.load %arg6[%c0_6, %c0_7] : memref<8x128xf32, #tpu.memory_space<vmem>>, vector<8x128xf32>
    tpu.vector_store %arg6[%c0_6, %c0_7], %7 {strides = array<i32>} : memref<8x128xf32, #tpu.memory_space<vmem>>, vector<8x128xf32>,
    %c0_i32_8 = arith.constant 0 : i32
    %9 = arith.cmpi eq, %arg1, %c0_i32_8 : i32
    %10 = arith.extui %9 : i1 to i32
    %c0_i32_9 = arith.constant 0 : i32
    %11 = arith.cmpi ne, %10, %c0_i32_9 : i32
    scf.if %11 {
      %c0_10 = arith.constant 0 : index
      %c0_11 = arith.constant 0 : index
      %12 = vector.load %arg6[%c0_10, %c0_11] : memref<8x128xf32, #tpu.memory_space<vmem>>, vector<8x128xf32>
      %cst_12 = arith.constant dense<0.000000e+00> : vector<128xf32>
      %13 = vector.multi_reduction <add>, %12, %cst_12 [0] : vector<8x128xf32> to vector<128xf32>
      %14 = vector.shape_cast %13 : vector<128xf32> to vector<1x128xf32>
      %15 = arith.mulf %12, %12 : vector<8x128xf32>
      %cst_13 = arith.constant dense<0.000000e+00> : vector<128xf32>
      %16 = vector.multi_reduction <add>, %15, %cst_13 [0] : vector<8x128xf32> to vector<128xf32>
      %17 = vector.shape_cast %16 : vector<128xf32> to vector<1x128xf32>
      %cst_14 = arith.constant 1.250000e-01 : f32
      %18 = vector.broadcast %cst_14 : f32 to vector<1x128xf32>
      %19 = arith.mulf %14, %18 : vector<1x128xf32>
      %cst_15 = arith.constant 1.250000e-01 : f32
      %20 = vector.broadcast %cst_15 : f32 to vector<1x128xf32>
      %21 = arith.mulf %17, %20 : vector<1x128xf32>
      %22 = arith.mulf %19, %19 : vector<1x128xf32>
      %23 = arith.subf %21, %22 : vector<1x128xf32>
      %cst_16 = arith.constant 0.000000e+00 : f32
      %24 = vector.broadcast %cst_16 : f32 to vector<1x128xf32>
      %25 = arith.maximumf %23, %24 : vector<1x128xf32>
      %c0_17 = arith.constant 0 : index
      %c0_18 = arith.constant 0 : index
      %26 = vector.load %arg4[%c0_17, %c0_18] : memref<1x128xf32, #tpu.memory_space<vmem>>, vector<1x128xf32>
      %cst_19 = arith.constant 9.99999974E-6 : f32
      %27 = vector.broadcast %cst_19 : f32 to vector<1x128xf32>
      %28 = arith.addf %25, %27 : vector<1x128xf32>
      %29 = math.rsqrt %28 : vector<1x128xf32>
      %30 = arith.mulf %26, %29 : vector<1x128xf32>
      %31 = vector.broadcast %19 : vector<1x128xf32> to vector<8x128xf32>
      %32 = arith.subf %12, %31 : vector<8x128xf32>
      %33 = vector.broadcast %30 : vector<1x128xf32> to vector<8x128xf32>
      %34 = arith.mulf %32, %33 : vector<8x128xf32>
      %c0_20 = arith.constant 0 : index
      %c0_21 = arith.constant 0 : index
      %35 = vector.load %arg5[%c0_20, %c0_21] : memref<1x128xf32, #tpu.memory_space<vmem>>, vector<1x128xf32>
      %36 = vector.broadcast %35 : vector<1x128xf32> to vector<8x128xf32>
      %37 = arith.addf %34, %36 : vector<8x128xf32>
      %cst_22 = arith.constant 0.000000e+00 : f32
      %38 = vector.broadcast %cst_22 : f32 to vector<8x128xf32>
      %39 = arith.maximumf %37, %38 : vector<8x128xf32>
      %c0_23 = arith.constant 0 : index
      %c0_24 = arith.constant 0 : index
      %40 = vector.load %arg6[%c0_23, %c0_24] : memref<8x128xf32, #tpu.memory_space<vmem>>, vector<8x128xf32>
      tpu.vector_store %arg6[%c0_23, %c0_24], %39 {strides = array<i32>} : memref<8x128xf32, #tpu.memory_space<vmem>>, vector<8x128xf32>,
    } else {
    }
    return
  }
  func.func @transform_0(%arg0: i32, %arg1: i32) -> (i32, i32) {
    %c0_i32 = arith.constant 0 : i32
    %c0_i32_0 = arith.constant 0 : i32
    return %c0_i32, %arg1 : i32, i32
  }
  func.func @transform_1(%arg0: i32, %arg1: i32) -> (i32, i32) {
    %c0_i32 = arith.constant 0 : i32
    return %arg1, %arg0 : i32, i32
  }
  func.func @transform_2(%arg0: i32, %arg1: i32) -> (i32, i32) {
    %c0_i32 = arith.constant 0 : i32
    %c0_i32_0 = arith.constant 0 : i32
    return %c0_i32, %arg0 : i32, i32
  }
  func.func @transform_3(%arg0: i32, %arg1: i32) -> (i32, i32) {
    %c0_i32 = arith.constant 0 : i32
    %c0_i32_0 = arith.constant 0 : i32
    return %c0_i32, %arg0 : i32, i32
  }
  func.func @transform_4(%arg0: i32, %arg1: i32) -> (i32, i32) {
    %c0_i32 = arith.constant 0 : i32
    %c0_i32_0 = arith.constant 0 : i32
    return %c0_i32, %arg0 : i32, i32
  }
}

</mosaic_0001>

<llo_original>
// kernel: tpu_custom_call.1
$region0: #{tpu_custom_call.1}
  #allocation0 [shape = 'u32[]', space=smem, size = 0x4, offset = 0x4, fixed_abs, tag = 'smem constant byte address 0x4 - core index']
  #allocation1 [shape = 'u32[144,128]{1,0:T(1,128)}', space=vmem, size = 0x12000, scoped, tag = 'internal scratch']
  %s0 = inlined_call_operand.hbm [shape: f32[8,128], index: 0, kind: input, shape index: {}]
  %s1 = inlined_call_operand.hbm [shape: f32[128,128], index: 1, kind: input, shape index: {}]
  %s2 = inlined_call_operand.vmem [shape: f32[1,128], index: 2, kind: input, shape index: {}]
  %s3 = inlined_call_operand.vmem [shape: f32[1,128], index: 3, kind: input, shape index: {}]
  %s4 = inlined_call_operand.hbm [shape: f32[8,128], index: 4, kind: output, shape index: {}]
  %s5 = sld [smem:[#allocation0]]
  $region42: #{tpu_custom_call.1} parent=0
    _
  %s7 = ssub.s32 1, %s5
  %s8 = scalar_select 0, %s7, %s5
  $region1: #{tpu_custom_call.1} parent=0
    #allocation2 [shape = 'u8[4096]{0}', space=vmem, size = 0x1000, scoped, tag = 'input window, operand 0, single buffered']
    #allocation3 [shape = 's32[1]{0}', space=sflag, size = 0x4, scoped, tag = 'scoped memory for tpu_custom_call.1']
    #allocation4 [shape = 's32[1]{0}', space=sflag, size = 0x4, scoped, tag = 'scoped memory for tpu_custom_call.1']
    #allocation5 [shape = 'u8[65536]{0}', space=vmem, size = 0x10000, scoped, tag = 'input window, operand 1, single buffered']
    #allocation6 [shape = 's32[1]{0}', space=sflag, size = 0x4, scoped, tag = 'scoped memory for tpu_custom_call.1']
    #allocation7 [shape = 'u8[4096]{0}', space=vmem, size = 0x1000, scoped, tag = 'output window, operand 0, single buffered']
    %9 = vsyncpa [#allocation3], 0
    %10 = vsyncpa [#allocation6], 0
    %11 = vsyncpa [#allocation4], 0
    // Predicated region
    $region2: #{tpu_custom_call.1} parent=1 // pred_check
      _
    $region3: #{tpu_custom_call.1} parent=1 // pred_check_branch
      %13 = sbr.rel (0) target = $region5
    $region4: #{tpu_custom_call.1} parent=1 // pred_region
      %s15 = ssub.s32 128, 128
      %16 = vsyncadd [#allocation3], %s15
      %s18 = sshll.u32 [#allocation2], 4
      %s19 = int_to_ptr.vmem [resolvable:$true] %s18
      %21 = dma.hbm_to_vmem [thread:$0]  %s0, 128, %s19, [#allocation3]
    $region5: #{tpu_custom_call.1} parent=1 // pred_fallthru
      _
    // Predicated region
    $region6: #{tpu_custom_call.1} parent=1 // pred_check
      _
    $region7: #{tpu_custom_call.1} parent=1 // pred_check_branch
      %23 = sbr.rel (0) target = $region9
    $region8: #{tpu_custom_call.1} parent=1 // pred_region
      %s25 = ssub.s32 2048, 2048
      %26 = vsyncadd [#allocation6], %s25
      %s27 = sshll.u32 [#allocation5], 4
      %s28 = int_to_ptr.vmem [resolvable:$true] %s27
      %33 = dma.hbm_to_vmem [thread:$0]  %s1, 2048, %s28, [#allocation6], 128, 128, 8
    $region9: #{tpu_custom_call.1} parent=1 // pred_fallthru
      _
    // Predicated region
    $region10: #{tpu_custom_call.1} parent=1 // pred_check
      _
    $region11: #{tpu_custom_call.1} parent=1 // pred_check_branch
      %35 = sbr.rel (0) target = $region13
    $region12: #{tpu_custom_call.1} parent=1 // pred_region
      _
    $region13: #{tpu_custom_call.1} parent=1 // pred_fallthru
      _
    // Predicated region
    $region14: #{tpu_custom_call.1} parent=1 // pred_check
      _
    $region15: #{tpu_custom_call.1} parent=1 // pred_check_branch
      %37 = sbr.rel (0) target = $region17
    $region16: #{tpu_custom_call.1} parent=1 // pred_region
      _
    $region17: #{tpu_custom_call.1} parent=1 // pred_fallthru
      _
    // Predicated region
    $region18: #{tpu_custom_call.1} parent=1 // pred_check
      _
    $region19: #{tpu_custom_call.1} parent=1 // pred_check_branch
      %39 = sbr.rel (0) target = $region21
    $region20: #{tpu_custom_call.1} parent=1 // pred_region
      %40 = dma.done [#allocation3], 128
    $region21: #{tpu_custom_call.1} parent=1 // pred_fallthru
      _
    // Predicated region
    $region22: #{tpu_custom_call.1} parent=1 // pred_check
      _
    $region23: #{tpu_custom_call.1} parent=1 // pred_check_branch
      %42 = sbr.rel (0) target = $region25
    $region24: #{tpu_custom_call.1} parent=1 // pred_region
      %43 = dma.done [#allocation6], 2048
    $region25: #{tpu_custom_call.1} parent=1 // pred_fallthru
      _
    %p44 = scmp.eq.s32.totalorder 0, 0
    // Predicated region
    $region26: #{tpu_custom_call.1} parent=1 // pred_check
      %p45 = pneg %p44
    $region27: #{tpu_custom_call.1} parent=1 // pred_check_branch
      %47 = sbr.rel (%p45) target = $region29
    $region28: #{tpu_custom_call.1} parent=1 // pred_region
      %48 = vst [vmem:[#allocation7] sm:$0xff] 0.0
    $region29: #{tpu_custom_call.1} parent=1 // pred_fallthru
      _
    %v49 = vld [vmem:[#allocation7] sm:$0xff]
    %v50 = vld [vmem:[#allocation2] sm:$0xff]
    %v51 = vld [vmem:[#allocation5] sm:$0xff]
    %v52 = vld [vmem:[#allocation5 + $0x8] sm:$0xff]
    %v53 = vld [vmem:[#allocation5 + $0x10] sm:$0xff]
    %v54 = vld [vmem:[#allocation5 + $0x18] sm:$0xff]
    %v55 = vld [vmem:[#allocation5 + $0x20] sm:$0xff]
    %v56 = vld [vmem:[#allocation5 + $0x28] sm:$0xff]
    %v57 = vld [vmem:[#allocation5 + $0x30] sm:$0xff]
    %v58 = vld [vmem:[#allocation5 + $0x38] sm:$0xff]
    %v59 = vld [vmem:[#allocation5 + $0x40] sm:$0xff]
    %v60 = vld [vmem:[#allocation5 + $0x48] sm:$0xff]
    %v61 = vld [vmem:[#allocation5 + $0x50] sm:$0xff]
    %v62 = vld [vmem:[#allocation5 + $0x58] sm:$0xff]
    %v63 = vld [vmem:[#allocation5 + $0x60] sm:$0xff]
    %v64 = vld [vmem:[#allocation5 + $0x68] sm:$0xff]
    %v65 = vld [vmem:[#allocation5 + $0x70] sm:$0xff]
    %v66 = vld [vmem:[#allocation5 + $0x78] sm:$0xff]
    %67 = vmatprep.subr.mxu0 0.0
    %68 = vmatpush1.msra.mxu0 %v66
    %69 = vmatprep.subr.mxu0 0.0
    %70 = vmatpush1.msra.mxu0 %v65
    %71 = vmatprep.subr.mxu0 0.0
    %72 = vmatpush1.msra.mxu0 %v64
    %73 = vmatprep.subr.mxu0 0.0
    %74 = vmatpush1.msra.mxu0 %v63
    %75 = vmatprep.subr.mxu0 0.0
    %76 = vmatpush1.msra.mxu0 %v62
    %77 = vmatprep.subr.mxu0 0.0
    %78 = vmatpush1.msra.mxu0 %v61
    %79 = vmatprep.subr.mxu0 0.0
    %80 = vmatpush1.msra.mxu0 %v60
    %81 = vmatprep.subr.mxu0 0.0
    %82 = vmatpush1.msra.mxu0 %v59
    %83 = vmatprep.subr.mxu0 0.0
    %84 = vmatpush1.msra.mxu0 %v58
    %85 = vmatprep.subr.mxu0 0.0
    %86 = vmatpush1.msra.mxu0 %v57
    %87 = vmatprep.subr.mxu0 0.0
    %88 = vmatpush1.msra.mxu0 %v56
    %89 = vmatprep.subr.mxu0 0.0
    %90 = vmatpush1.msra.mxu0 %v55
    %91 = vmatprep.subr.mxu0 0.0
    %92 = vmatpush1.msra.mxu0 %v54
    %93 = vmatprep.subr.mxu0 0.0
    %94 = vmatpush1.msra.mxu0 %v53
    %95 = vmatprep.subr.mxu0 0.0
    %96 = vmatpush1.msra.mxu0 %v52
    %97 = vmatprep.subr.mxu0 0.0
    %98 = vmatpush1.msra.mxu0 %v51
    %99 = vmatprep.subr.mxu0 0.0
    %100 = vmatpush2.msra.mxu0 0.0
    %101 = vmatprep.subr.mxu0 0.0
    %102 = vmatpush2.msra.mxu0 0.0
    %103 = vmatprep.subr.mxu0 0.0
    %104 = vmatpush2.msra.mxu0 0.0
    %105 = vmatprep.subr.mxu0 0.0
    %106 = vmatpush2.msra.mxu0 0.0
    %107 = vmatprep.subr.mxu0 0.0
    %108 = vmatpush2.msra.mxu0 0.0
    %109 = vmatprep.subr.mxu0 0.0
    %110 = vmatpush2.msra.mxu0 0.0
    %111 = vmatprep.subr.mxu0 0.0
    %112 = vmatpush2.msra.mxu0 0.0
    %113 = vmatprep.subr.mxu0 0.0
    %114 = vmatpush2.msra.mxu0 0.0
    %115 = vmatprep.subr.mxu0 0.0
    %116 = vmatpush2.msra.mxu0 0.0
    %117 = vmatprep.subr.mxu0 0.0
    %118 = vmatpush2.msra.mxu0 0.0
    %119 = vmatprep.subr.mxu0 0.0
    %120 = vmatpush2.msra.mxu0 0.0
    %121 = vmatprep.subr.mxu0 0.0
    %122 = vmatpush2.msra.mxu0 0.0
    %123 = vmatprep.subr.mxu0 0.0
    %124 = vmatpush2.msra.mxu0 0.0
    %125 = vmatprep.subr.mxu0 0.0
    %126 = vmatpush2.msra.mxu0 0.0
    %127 = vmatprep.subr.mxu0 0.0
    %128 = vmatpush2.msra.mxu0 0.0
    %129 = vmatprep.subr.mxu0 0.0
    %130 = vmatpush2.msra.mxu0 0.0
    %131 = vmatprep.mubr.f32.mxu0 0.0
    %132 = vmatmul.mubr.f32.gmra.mxu0 %v50
    %v133 = vpop.f32.mrf.mxu0
    %v134 = vadd.f32 0.0, %v133
    %v135 = vpop.f32.mrf.mxu0
    %136 = vdwg.mxu0
    %v137 = vadd.f32 %v49, %v134
    %138 = vst [vmem:[#allocation7] sm:$0xff] %v137
    // Predicated region
    $region30: #{tpu_custom_call.1} parent=1 // pred_check
      %p139 = pneg %p44
    $region31: #{tpu_custom_call.1} parent=1 // pred_check_branch
      %141 = sbr.rel (%p139) target = $region33
    $region32: #{tpu_custom_call.1} parent=1 // pred_region
      %v142 = vld [vmem:[#allocation7] sm:$0xff]
      %v143 = vrot.slane %v142, 4
      %v144 = vadd.f32 %v142, %v143
      %v145 = vrot.slane %v144, 2
      %v146 = vadd.f32 %v144, %v145
      %v147 = vrot.slane %v146, 1
      %v148 = vadd.f32 %v146, %v147
      %v149 = vmul.f32 %v142, %v142
      %v150 = vrot.slane %v149, 4
      %v151 = vadd.f32 %v149, %v150
      %v152 = vrot.slane %v151, 2
      %v153 = vadd.f32 %v151, %v152
      %v154 = vrot.slane %v153, 1
      %v155 = vadd.f32 %v153, %v154
      %v156 = vmul.f32 %v148, 0.125
      %v157 = vmul.f32 %v155, 0.125
      %v158 = vmul.f32 %v156, %v156
      %v159 = vsub.f32 %v157, %v158
      %v160 = vmax.f32 %v159, 0.0
      %v161 = vld [vmem:[%s2] sm:$0x1]
      %v162 = vadd.f32 %v160, 1e-05
      %v163 = vrsqrt.pop %v162
      %v164 = vmul.f32 %v161, %v163
      %v165 = vsub.f32 %v142, %v156
      %v167 = vlaneseq
      %v168 = vshrl.u32 %v167, 7
      %v169 = vsub.s32 0, %v168
      %v170 = vrot.slane %v164, %v169
      %v172 = vmul.f32 %v165, %v170
      %v173 = vld [vmem:[%s3] sm:$0x1]
      %v175 = vlaneseq
      %v176 = vshrl.u32 %v175, 7
      %v177 = vsub.s32 0, %v176
      %v178 = vrot.slane %v173, %v177
      %v180 = vadd.f32 %v172, %v178
      %v181 = vmax.f32 %v180, 0.0
      %182 = vst [vmem:[#allocation7] sm:$0xff] %v181
    $region33: #{tpu_custom_call.1} parent=1 // pred_fallthru
      _
    // Predicated region
    $region34: #{tpu_custom_call.1} parent=1 // pred_check
      _
    $region35: #{tpu_custom_call.1} parent=1 // pred_check_branch
      %184 = sbr.rel (0) target = $region37
    $region36: #{tpu_custom_call.1} parent=1 // pred_region
      %s186 = ssub.s32 128, 128
      %187 = vsyncadd [#allocation4], %s186
      %s189 = sshll.u32 [#allocation7], 4
      %s190 = int_to_ptr.vmem [resolvable:$true] %s189
      %192 = dma.vmem_to_hbm [thread:$0]  %s190, 128, %s4, [#allocation4]
    $region37: #{tpu_custom_call.1} parent=1 // pred_fallthru
      _
    // Predicated region
    $region38: #{tpu_custom_call.1} parent=1 // pred_check
      _
    $region39: #{tpu_custom_call.1} parent=1 // pred_check_branch
      %194 = sbr.rel (0) target = $region41
    $region40: #{tpu_custom_call.1} parent=1 // pred_region
      %195 = dma.done [#allocation4], 128
    $region41: #{tpu_custom_call.1} parent=1 // pred_fallthru
      _
    %196 = vsyncpa [#allocation3], 1
    %197 = vsyncpa [#allocation6], 1
    %198 = vsyncpa [#allocation4], 1

</llo_original>
